<compile_context>
chip_gen: v5e
topology: v5e:2x2
jax: 0.10.0
libtpu: 0.0.40
codegen_flags: <defaults>
</compile_context>

<pallas_src>
import numpy as np
import jax
import jax.numpy as jnp
from jax.experimental import pallas as pl
from jax.experimental.pallas import tpu as pltpu  # noqa: F401  (TPU backend)


# ------------------------- model constants -------------------------

D_IN, H_IN, W_IN = 16, 7, 7
KD = KH = KW = 6
OD, OH, OW = D_IN - KD + 1, H_IN - KH + 1, W_IN - KW + 1          # 11, 2, 2
NPOS = OD * OH * OW                                                # 44
C_OUT = 30
FEAT = C_OUT * NPOS                                                # 1320
PIX = D_IN * H_IN * W_IN                                           # 784


# ------------------------- Pallas kernel (fully fused) -------------------------

def fused_kernel(x_ref, wf_ref, bf_ref, w4t_ref, w6t_ref, w8t_ref, o_ref):
    f32 = jnp.float32

    # --- folded Conv3d + flatten + f1 + f2, then f3 ReLU ---
    h = jnp.dot(x_ref[...], wf_ref[...], preferred_element_type=f32) + bf_ref[...]
    h = jnp.maximum(h, 0.0)                                                       # f3

    # --- f4..f8 with ReLUs (f5, f7) ---
    h = jnp.maximum(jnp.dot(h, w4t_ref[...], preferred_element_type=f32), 0.0)    # f4, f5
    h = jnp.maximum(jnp.dot(h, w6t_ref[...], preferred_element_type=f32), 0.0)    # f6, f7
    logits = jnp.dot(h, w8t_ref[...], preferred_element_type=f32)                 # f8: (B, 10)

    # --- f9: LogSoftmax(dim=1), numerically stable ---
    m = jnp.max(logits, axis=-1, keepdims=True)
    lse = m + jnp.log(jnp.sum(jnp.exp(logits - m), axis=-1, keepdims=True))
    o_ref[...] = (logits - lse).astype(o_ref.dtype)


# ------------------------- one-time parameter preparation (outside jit) -------------------------

def prepare_params(params):
    """Fold Conv3d -> channel-major flatten -> f1 -> f2 into one (784, 67) GEMM.

    The whole chain is linear (conv has no bias/activation before f1, and there
    is no ReLU between f1 and f2), so the fold is exact.  Done in float64 on the
    host, cast to float32 at the end.
    """
    conv_w, w1, b1, w2, w4, w6, w8 = (np.asarray(p, np.float64) for p in params)

    # Conv3d(1->30, k=6, valid, no bias) as a (784, 1320) matrix C acting on
    # x.view(B, 784); columns follow PyTorch's channel-major flatten
    # f = c*44 + od*4 + oh*2 + ow.
    C = np.zeros((PIX, FEAT), np.float64)
    for od in range(OD):
        for oh in range(OH):
            for ow in range(OW):
                fsp = od * (OH * OW) + oh * OW + ow
                for kd in range(KD):
                    for kh in range(KH):
                        for kw in range(KW):
                            p = (od + kd) * (H_IN * W_IN) + (oh + kh) * W_IN + (ow + kw)
                            C[p, fsp::NPOS] = conv_w[:, 0, kd, kh, kw]

    wfold = C @ w1.T @ w2.T            # (784, 67)
    bfold = b1 @ w2.T                  # (67,)   (f2 has no bias)

    prep = (wfold, bfold.reshape(1, -1), w4.T, w6.T, w8.T)
    return tuple(jnp.asarray(np.ascontiguousarray(a), jnp.float32) for a in prep)


# ------------------------- forward (single pallas_call under jit) -------------------------

@jax.jit
def conv3d_then_linear_92(x, prep):
    b = x.shape[0]
    x2d = x.reshape(b, PIX).astype(jnp.float32)     # free view: (B, 784)
    flops = 2 * b * (PIX * 67 + 67 * 37 + 37 * 16 + 16 * 10)
    bytes_accessed = ((PIX * 67 + 67 + 67 * 37 + 37 * 16 + 16 * 10) * 4
                      + b * PIX * 4 + b * 10 * 4)
    return pl.pallas_call(
        fused_kernel,
        out_shape=jax.ShapeDtypeStruct((b, 10), jnp.float32),
        cost_estimate=pl.CostEstimate(flops=flops,
                                      transcendentals=11 * b,
                                      bytes_accessed=bytes_accessed),
    )(x2d, *prep)


# ------------------------- reference (pure JAX) -------------------------

def reference(x, params):
    conv_w, w1, b1, w2, w4, w6, w8 = params
    b = x.shape[0]
    x5 = x.reshape(b, 1, D_IN, H_IN, W_IN)
    c = jax.lax.conv_general_dilated(
        x5, conv_w, window_strides=(1, 1, 1), padding="VALID",
        dimension_numbers=("NCDHW", "OIDHW", "NCDHW"))
    h = c.reshape(b, FEAT)
    h = h @ w1.T + b1
    h = h @ w2.T
    h = jnp.maximum(h, 0.0)
    h = jnp.maximum(h @ w4.T, 0.0)
    h = jnp.maximum(h @ w6.T, 0.0)
    logits = h @ w8.T
    return jax.nn.log_softmax(logits, axis=1)


# ------------------------- main -------------------------

def _uinit(key, shape, fan_in):
    bound = 1.0 / (fan_in ** 0.5)
    return jax.random.uniform(key, shape, jnp.float32, -bound, bound)


if __name__ == "__main__":
    key = jax.random.PRNGKey(0)
    ks = jax.random.split(key, 8)

    # deterministic synthetic parameters (shapes from the PyTorch __init__)
    conv_w = _uinit(ks[0], (30, 1, 6, 6, 6), 216)        # f0 (bias=False)
    w1 = _uinit(ks[1], (81, 1320), 1320)                 # f1 weight
    b1 = _uinit(ks[2], (81,), 1320)                      # f1 bias
    w2 = _uinit(ks[3], (67, 81), 81)                     # f2
    w4 = _uinit(ks[4], (37, 67), 67)                     # f4
    w6 = _uinit(ks[5], (16, 37), 37)                     # f6
    w8 = _uinit(ks[6], (10, 16), 16)                     # f8
    params = (conv_w, w1, b1, w2, w4, w6, w8)

    batch = 8
    x = jax.random.normal(ks[7], (batch, 1, 28, 28), jnp.float32)   # 784 elems -> view(B,1,16,7,7)

    prep = prepare_params(params)                        # one-time, outside jit, batch-independent

    out = conv3d_then_linear_92(x, prep)
    out = jax.block_until_ready(out)

    ref = reference(x, params)
    assert out.shape == (batch, 10)
    assert jnp.allclose(out, ref, atol=1e-4, rtol=1e-4), "mismatch vs reference"

    print("KERNEL_OK")
</pallas_src>

<mosaic_0001>
module attributes {stable_mosaic.version = 11 : i64} {
  func.func @fused_kernel(%arg0: memref<8x784xf32, #tpu.memory_space<vmem>>, %arg1: memref<784x67xf32, #tpu.memory_space<vmem>>, %arg2: memref<1x67xf32, #tpu.memory_space<vmem>>, %arg3: memref<67x37xf32, #tpu.memory_space<vmem>>, %arg4: memref<37x16xf32, #tpu.memory_space<vmem>>, %arg5: memref<16x10xf32, #tpu.memory_space<vmem>>, %arg6: memref<8x10xf32, #tpu.memory_space<vmem>>) attributes {dimension_semantics = [], scalar_prefetch = 0 : i64, scratch_operands = 0 : i64, tpu.core_type = #tpu.core_type<tc>} {
    %c0 = arith.constant 0 : index
    %c0_0 = arith.constant 0 : index
    %0 = vector.load %arg0[%c0, %c0_0] : memref<8x784xf32, #tpu.memory_space<vmem>>, vector<8x784xf32>
    %c0_1 = arith.constant 0 : index
    %c0_2 = arith.constant 0 : index
    %1 = vector.load %arg1[%c0_1, %c0_2] : memref<784x67xf32, #tpu.memory_space<vmem>>, vector<784x67xf32>
    %cst = arith.constant dense<0.000000e+00> : vector<8x67xf32>
    %2 = tpu.matmul %0, %1, %cst {dimension_numbers = #tpu.dot_dimension_numbers<[1], [0], [0], [1], [0, 0, 1, 1], [], []>} : vector<8x784xf32>, vector<784x67xf32>, vector<8x67xf32> -> vector<8x67xf32>
    %c0_3 = arith.constant 0 : index
    %c0_4 = arith.constant 0 : index
    %3 = vector.load %arg2[%c0_3, %c0_4] : memref<1x67xf32, #tpu.memory_space<vmem>>, vector<1x67xf32>
    %4 = vector.broadcast %3 : vector<1x67xf32> to vector<8x67xf32>
    %5 = arith.addf %2, %4 : vector<8x67xf32>
    %cst_5 = arith.constant 0.000000e+00 : f32
    %6 = vector.broadcast %cst_5 : f32 to vector<8x67xf32>
    %7 = arith.maximumf %5, %6 : vector<8x67xf32>
    %c0_6 = arith.constant 0 : index
    %c0_7 = arith.constant 0 : index
    %8 = vector.load %arg3[%c0_6, %c0_7] : memref<67x37xf32, #tpu.memory_space<vmem>>, vector<67x37xf32>
    %cst_8 = arith.constant dense<0.000000e+00> : vector<8x37xf32>
    %9 = tpu.matmul %7, %8, %cst_8 {dimension_numbers = #tpu.dot_dimension_numbers<[1], [0], [0], [1], [0, 0, 1, 1], [], []>} : vector<8x67xf32>, vector<67x37xf32>, vector<8x37xf32> -> vector<8x37xf32>
    %cst_9 = arith.constant 0.000000e+00 : f32
    %10 = vector.broadcast %cst_9 : f32 to vector<8x37xf32>
    %11 = arith.maximumf %9, %10 : vector<8x37xf32>
    %c0_10 = arith.constant 0 : index
    %c0_11 = arith.constant 0 : index
    %12 = vector.load %arg4[%c0_10, %c0_11] : memref<37x16xf32, #tpu.memory_space<vmem>>, vector<37x16xf32>
    %cst_12 = arith.constant dense<0.000000e+00> : vector<8x16xf32>
    %13 = tpu.matmul %11, %12, %cst_12 {dimension_numbers = #tpu.dot_dimension_numbers<[1], [0], [0], [1], [0, 0, 1, 1], [], []>} : vector<8x37xf32>, vector<37x16xf32>, vector<8x16xf32> -> vector<8x16xf32>
    %cst_13 = arith.constant 0.000000e+00 : f32
    %14 = vector.broadcast %cst_13 : f32 to vector<8x16xf32>
    %15 = arith.maximumf %13, %14 : vector<8x16xf32>
    %c0_14 = arith.constant 0 : index
    %c0_15 = arith.constant 0 : index
    %16 = vector.load %arg5[%c0_14, %c0_15] : memref<16x10xf32, #tpu.memory_space<vmem>>, vector<16x10xf32>
    %cst_16 = arith.constant dense<0.000000e+00> : vector<8x10xf32>
    %17 = tpu.matmul %15, %16, %cst_16 {dimension_numbers = #tpu.dot_dimension_numbers<[1], [0], [0], [1], [0, 0, 1, 1], [], []>} : vector<8x16xf32>, vector<16x10xf32>, vector<8x10xf32> -> vector<8x10xf32>
    %cst_17 = arith.constant dense<0xFF800000> : vector<8xf32>
    %18 = vector.multi_reduction <maximumf>, %17, %cst_17 [1] : vector<8x10xf32> to vector<8xf32>
    %19 = vector.shape_cast %18 : vector<8xf32> to vector<8x1xf32>
    %20 = vector.broadcast %19 : vector<8x1xf32> to vector<8x10xf32>
    %21 = arith.subf %17, %20 : vector<8x10xf32>
    %22 = math.exp %21 : vector<8x10xf32>
    %cst_18 = arith.constant dense<0.000000e+00> : vector<8xf32>
    %23 = vector.multi_reduction <add>, %22, %cst_18 [1] : vector<8x10xf32> to vector<8xf32>
    %24 = vector.shape_cast %23 : vector<8xf32> to vector<8x1xf32>
    %25 = math.log %24 : vector<8x1xf32>
    %26 = arith.addf %19, %25 : vector<8x1xf32>
    %27 = vector.broadcast %26 : vector<8x1xf32> to vector<8x10xf32>
    %28 = arith.subf %17, %27 : vector<8x10xf32>
    %c0_19 = arith.constant 0 : index
    %c0_20 = arith.constant 0 : index
    %29 = vector.load %arg6[%c0_19, %c0_20] : memref<8x10xf32, #tpu.memory_space<vmem>>, vector<8x10xf32>
    tpu.vector_store %arg6[%c0_19, %c0_20], %28 {strides = array<i32>} : memref<8x10xf32, #tpu.memory_space<vmem>>, vector<8x10xf32>,
    return
  }
}

</mosaic_0001>

<llo_original>
// kernel: conv3d_then_linear_92.1
$region0: #{conv3d_then_linear_92.1}
  #allocation0 [shape = 'u32[]', space=smem, size = 0x4, offset = 0x4, fixed_abs, tag = 'smem constant byte address 0x4 - core index']
  #allocation1 [shape = 'u32[72,128]{1,0:T(1,128)}', space=vmem, size = 0x9000, scoped, tag = 'internal scratch']
  %s0 = inlined_call_operand.vmem [shape: f32[8,784], index: 0, kind: input, shape index: {}]
  %s1 = inlined_call_operand.vmem [shape: f32[784,67], index: 1, kind: input, shape index: {}]
  %s2 = inlined_call_operand.vmem [shape: f32[1,67], index: 2, kind: input, shape index: {}]
  %s3 = inlined_call_operand.vmem [shape: f32[67,37], index: 3, kind: input, shape index: {}]
  %s4 = inlined_call_operand.vmem [shape: f32[37,16], index: 4, kind: input, shape index: {}]
  %s5 = inlined_call_operand.vmem [shape: f32[16,10], index: 5, kind: input, shape index: {}]
  %s6 = inlined_call_operand.hbm [shape: f32[8,10], index: 6, kind: output, shape index: {}]
  %s7 = sld [smem:[#allocation0]]
  $region34: #{conv3d_then_linear_92.1} parent=0
    _
  %s9 = ssub.s32 1, %s7
  %s10 = scalar_select 0, %s9, %s7
  $region1: #{conv3d_then_linear_92.1} parent=0
    #allocation2 [shape = 'u8[4096]{0}', space=vmem, size = 0x1000, scoped, tag = 'output window, operand 0, single buffered']
    #allocation3 [shape = 's32[1]{0}', space=sflag, size = 0x4, scoped, tag = 'scoped memory for conv3d_then_linear_92.1']
    %11 = vsyncpa [#allocation3], 0
    // Predicated region
    $region2: #{conv3d_then_linear_92.1} parent=1 // pred_check
      _
    $region3: #{conv3d_then_linear_92.1} parent=1 // pred_check_branch
      %13 = sbr.rel (0) target = $region5
    $region4: #{conv3d_then_linear_92.1} parent=1 // pred_region
      _
    $region5: #{conv3d_then_linear_92.1} parent=1 // pred_fallthru
      _
    // Predicated region
    $region6: #{conv3d_then_linear_92.1} parent=1 // pred_check
      _
    $region7: #{conv3d_then_linear_92.1} parent=1 // pred_check_branch
      %15 = sbr.rel (0) target = $region9
    $region8: #{conv3d_then_linear_92.1} parent=1 // pred_region
      _
    $region9: #{conv3d_then_linear_92.1} parent=1 // pred_fallthru
      _
    // Predicated region
    $region10: #{conv3d_then_linear_92.1} parent=1 // pred_check
      _
    $region11: #{conv3d_then_linear_92.1} parent=1 // pred_check_branch
      %17 = sbr.rel (0) target = $region13
    $region12: #{conv3d_then_linear_92.1} parent=1 // pred_region
      _
    $region13: #{conv3d_then_linear_92.1} parent=1 // pred_fallthru
      _
    // Predicated region
    $region14: #{conv3d_then_linear_92.1} parent=1 // pred_check
      _
    $region15: #{conv3d_then_linear_92.1} parent=1 // pred_check_branch
      %19 = sbr.rel (0) target = $region17
    $region16: #{conv3d_then_linear_92.1} parent=1 // pred_region
      _
    $region17: #{conv3d_then_linear_92.1} parent=1 // pred_fallthru
      _
    // Predicated region
    $region18: #{conv3d_then_linear_92.1} parent=1 // pred_check
      _
    $region19: #{conv3d_then_linear_92.1} parent=1 // pred_check_branch
      %21 = sbr.rel (0) target = $region21
    $region20: #{conv3d_then_linear_92.1} parent=1 // pred_region
      _
    $region21: #{conv3d_then_linear_92.1} parent=1 // pred_fallthru
      _
    // Predicated region
    $region22: #{conv3d_then_linear_92.1} parent=1 // pred_check
      _
    $region23: #{conv3d_then_linear_92.1} parent=1 // pred_check_branch
      %23 = sbr.rel (0) target = $region25
    $region24: #{conv3d_then_linear_92.1} parent=1 // pred_region
      _
    $region25: #{conv3d_then_linear_92.1} parent=1 // pred_fallthru
      _
    %v24 = vld [vmem:[%s0] sm:$0xff]
    %v25 = vld [vmem:[%s0 + $0x8] sm:$0xff]
    %v26 = vld [vmem:[%s0 + $0x10] sm:$0xff]
    %v27 = vld [vmem:[%s0 + $0x18] sm:$0xff]
    %v28 = vld [vmem:[%s0 + $0x20] sm:$0xff]
    %v29 = vld [vmem:[%s0 + $0x28] sm:$0xff]
    %v30 = vld [vmem:[%s0 + $0x30] sm:$0xff]
    %v31 = vld [vmem:[%s1] sm:$0xff]
    %v32 = vld [vmem:[%s1 + $0x8] sm:$0xff]
    %v33 = vld [vmem:[%s1 + $0x10] sm:$0xff]
    %v34 = vld [vmem:[%s1 + $0x18] sm:$0xff]
    %v35 = vld [vmem:[%s1 + $0x20] sm:$0xff]
    %v36 = vld [vmem:[%s1 + $0x28] sm:$0xff]
    %v37 = vld [vmem:[%s1 + $0x30] sm:$0xff]
    %v38 = vld [vmem:[%s1 + $0x38] sm:$0xff]
    %v39 = vld [vmem:[%s1 + $0x40] sm:$0xff]
    %v40 = vld [vmem:[%s1 + $0x48] sm:$0xff]
    %v41 = vld [vmem:[%s1 + $0x50] sm:$0xff]
    %v42 = vld [vmem:[%s1 + $0x58] sm:$0xff]
    %v43 = vld [vmem:[%s1 + $0x60] sm:$0xff]
    %v44 = vld [vmem:[%s1 + $0x68] sm:$0xff]
    %v45 = vld [vmem:[%s1 + $0x70] sm:$0xff]
    %v46 = vld [vmem:[%s1 + $0x78] sm:$0xff]
    %v47 = vld [vmem:[%s1 + $0x80] sm:$0xff]
    %v48 = vld [vmem:[%s1 + $0x88] sm:$0xff]
    %v49 = vld [vmem:[%s1 + $0x90] sm:$0xff]
    %v50 = vld [vmem:[%s1 + $0x98] sm:$0xff]
    %v51 = vld [vmem:[%s1 + $0xa0] sm:$0xff]
    %v52 = vld [vmem:[%s1 + $0xa8] sm:$0xff]
    %v53 = vld [vmem:[%s1 + $0xb0] sm:$0xff]
    %v54 = vld [vmem:[%s1 + $0xb8] sm:$0xff]
    %v55 = vld [vmem:[%s1 + $0xc0] sm:$0xff]
    %v56 = vld [vmem:[%s1 + $0xc8] sm:$0xff]
    %v57 = vld [vmem:[%s1 + $0xd0] sm:$0xff]
    %v58 = vld [vmem:[%s1 + $0xd8] sm:$0xff]
    %v59 = vld [vmem:[%s1 + $0xe0] sm:$0xff]
    %v60 = vld [vmem:[%s1 + $0xe8] sm:$0xff]
    %v61 = vld [vmem:[%s1 + $0xf0] sm:$0xff]
    %v62 = vld [vmem:[%s1 + $0xf8] sm:$0xff]
    %v63 = vld [vmem:[%s1 + $0x100] sm:$0xff]
    %v64 = vld [vmem:[%s1 + $0x108] sm:$0xff]
    %v65 = vld [vmem:[%s1 + $0x110] sm:$0xff]
    %v66 = vld [vmem:[%s1 + $0x118] sm:$0xff]
    %v67 = vld [vmem:[%s1 + $0x120] sm:$0xff]
    %v68 = vld [vmem:[%s1 + $0x128] sm:$0xff]
    %v69 = vld [vmem:[%s1 + $0x130] sm:$0xff]
    %v70 = vld [vmem:[%s1 + $0x138] sm:$0xff]
    %v71 = vld [vmem:[%s1 + $0x140] sm:$0xff]
    %v72 = vld [vmem:[%s1 + $0x148] sm:$0xff]
    %v73 = vld [vmem:[%s1 + $0x150] sm:$0xff]
    %v74 = vld [vmem:[%s1 + $0x158] sm:$0xff]
    %v75 = vld [vmem:[%s1 + $0x160] sm:$0xff]
    %v76 = vld [vmem:[%s1 + $0x168] sm:$0xff]
    %v77 = vld [vmem:[%s1 + $0x170] sm:$0xff]
    %v78 = vld [vmem:[%s1 + $0x178] sm:$0xff]
    %v79 = vld [vmem:[%s1 + $0x180] sm:$0xff]
    %v80 = vld [vmem:[%s1 + $0x188] sm:$0xff]
    %v81 = vld [vmem:[%s1 + $0x190] sm:$0xff]
    %v82 = vld [vmem:[%s1 + $0x198] sm:$0xff]
    %v83 = vld [vmem:[%s1 + $0x1a0] sm:$0xff]
    %v84 = vld [vmem:[%s1 + $0x1a8] sm:$0xff]
    %v85 = vld [vmem:[%s1 + $0x1b0] sm:$0xff]
    %v86 = vld [vmem:[%s1 + $0x1b8] sm:$0xff]
    %v87 = vld [vmem:[%s1 + $0x1c0] sm:$0xff]
    %v88 = vld [vmem:[%s1 + $0x1c8] sm:$0xff]
    %v89 = vld [vmem:[%s1 + $0x1d0] sm:$0xff]
    %v90 = vld [vmem:[%s1 + $0x1d8] sm:$0xff]
    %v91 = vld [vmem:[%s1 + $0x1e0] sm:$0xff]
    %v92 = vld [vmem:[%s1 + $0x1e8] sm:$0xff]
    %v93 = vld [vmem:[%s1 + $0x1f0] sm:$0xff]
    %v94 = vld [vmem:[%s1 + $0x1f8] sm:$0xff]
    %v95 = vld [vmem:[%s1 + $0x200] sm:$0xff]
    %v96 = vld [vmem:[%s1 + $0x208] sm:$0xff]
    %v97 = vld [vmem:[%s1 + $0x210] sm:$0xff]
    %v98 = vld [vmem:[%s1 + $0x218] sm:$0xff]
    %v99 = vld [vmem:[%s1 + $0x220] sm:$0xff]
    %v100 = vld [vmem:[%s1 + $0x228] sm:$0xff]
    %v101 = vld [vmem:[%s1 + $0x230] sm:$0xff]
    %v102 = vld [vmem:[%s1 + $0x238] sm:$0xff]
    %v103 = vld [vmem:[%s1 + $0x240] sm:$0xff]
    %v104 = vld [vmem:[%s1 + $0x248] sm:$0xff]
    %v105 = vld [vmem:[%s1 + $0x250] sm:$0xff]
    %v106 = vld [vmem:[%s1 + $0x258] sm:$0xff]
    %v107 = vld [vmem:[%s1 + $0x260] sm:$0xff]
    %v108 = vld [vmem:[%s1 + $0x268] sm:$0xff]
    %v109 = vld [vmem:[%s1 + $0x270] sm:$0xff]
    %v110 = vld [vmem:[%s1 + $0x278] sm:$0xff]
    %v111 = vld [vmem:[%s1 + $0x280] sm:$0xff]
    %v112 = vld [vmem:[%s1 + $0x288] sm:$0xff]
    %v113 = vld [vmem:[%s1 + $0x290] sm:$0xff]
    %v114 = vld [vmem:[%s1 + $0x298] sm:$0xff]
    %v115 = vld [vmem:[%s1 + $0x2a0] sm:$0xff]
    %v116 = vld [vmem:[%s1 + $0x2a8] sm:$0xff]
    %v117 = vld [vmem:[%s1 + $0x2b0] sm:$0xff]
    %v118 = vld [vmem:[%s1 + $0x2b8] sm:$0xff]
    %v119 = vld [vmem:[%s1 + $0x2c0] sm:$0xff]
    %v120 = vld [vmem:[%s1 + $0x2c8] sm:$0xff]
    %v121 = vld [vmem:[%s1 + $0x2d0] sm:$0xff]
    %v122 = vld [vmem:[%s1 + $0x2d8] sm:$0xff]
    %v123 = vld [vmem:[%s1 + $0x2e0] sm:$0xff]
    %v124 = vld [vmem:[%s1 + $0x2e8] sm:$0xff]
    %v125 = vld [vmem:[%s1 + $0x2f0] sm:$0xff]
    %v126 = vld [vmem:[%s1 + $0x2f8] sm:$0xff]
    %v127 = vld [vmem:[%s1 + $0x300] sm:$0xff]
    %v128 = vld [vmem:[%s1 + $0x308] sm:$0xff]
    %v129 = vld [vmem:[%s2] sm:$0x1]
    %v131 = vperm.slane %v129, 0
    %vm133 = vcmask 130048
    %v135 = vsel %vm133, %v30, 0
    %137 = vmatpush.msra.mxu0 %v46
    %138 = vmatpush.msra.mxu0 %v45
    %139 = vmatpush.msra.mxu0 %v44
    %140 = vmatpush.msra.mxu0 %v43
    %141 = vmatpush.msra.mxu0 %v42
    %142 = vmatpush.msra.mxu0 %v41
    %143 = vmatpush.msra.mxu0 %v40
    %144 = vmatpush.msra.mxu0 %v39
    %145 = vmatpush.msra.mxu0 %v38
    %146 = vmatpush.msra.mxu0 %v37
    %147 = vmatpush.msra.mxu0 %v36
    %148 = vmatpush.msra.mxu0 %v35
    %149 = vmatpush.msra.mxu0 %v34
    %150 = vmatpush.msra.mxu0 %v33
    %151 = vmatpush.msra.mxu0 %v32
    %152 = vmatpush.msra.mxu0 %v31
    %153 = vmatmul.f32.gmra.mxu0 %v24
    %v154 = vpop.f32.mrf.mxu0
    %v155 = vadd.f32 %v131, %v154
    %156 = vdwg.mxu0
    %157 = vmatpush.msra.mxu0 %v62
    %158 = vmatpush.msra.mxu0 %v61
    %159 = vmatpush.msra.mxu0 %v60
    %160 = vmatpush.msra.mxu0 %v59
    %161 = vmatpush.msra.mxu0 %v58
    %162 = vmatpush.msra.mxu0 %v57
    %163 = vmatpush.msra.mxu0 %v56
    %164 = vmatpush.msra.mxu0 %v55
    %165 = vmatpush.msra.mxu0 %v54
    %166 = vmatpush.msra.mxu0 %v53
    %167 = vmatpush.msra.mxu0 %v52
    %168 = vmatpush.msra.mxu0 %v51
    %169 = vmatpush.msra.mxu0 %v50
    %170 = vmatpush.msra.mxu0 %v49
    %171 = vmatpush.msra.mxu0 %v48
    %172 = vmatpush.msra.mxu0 %v47
    %173 = vmatmul.f32.gmra.mxu0 %v25
    %v174 = vpop.f32.mrf.mxu0
    %v175 = vadd.f32 %v155, %v174
    %176 = vdwg.mxu0
    %177 = vmatpush.msra.mxu0 %v78
    %178 = vmatpush.msra.mxu0 %v77
    %179 = vmatpush.msra.mxu0 %v76
    %180 = vmatpush.msra.mxu0 %v75
    %181 = vmatpush.msra.mxu0 %v74
    %182 = vmatpush.msra.mxu0 %v73
    %183 = vmatpush.msra.mxu0 %v72
    %184 = vmatpush.msra.mxu0 %v71
    %185 = vmatpush.msra.mxu0 %v70
    %186 = vmatpush.msra.mxu0 %v69
    %187 = vmatpush.msra.mxu0 %v68
    %188 = vmatpush.msra.mxu0 %v67
    %189 = vmatpush.msra.mxu0 %v66
    %190 = vmatpush.msra.mxu0 %v65
    %191 = vmatpush.msra.mxu0 %v64
    %192 = vmatpush.msra.mxu0 %v63
    %193 = vmatmul.f32.gmra.mxu0 %v26
    %v194 = vpop.f32.mrf.mxu0
    %v195 = vadd.f32 %v175, %v194
    %196 = vdwg.mxu0
    %197 = vmatpush.msra.mxu0 %v94
    %198 = vmatpush.msra.mxu0 %v93
    %199 = vmatpush.msra.mxu0 %v92
    %200 = vmatpush.msra.mxu0 %v91
    %201 = vmatpush.msra.mxu0 %v90
    %202 = vmatpush.msra.mxu0 %v89
    %203 = vmatpush.msra.mxu0 %v88
    %204 = vmatpush.msra.mxu0 %v87
    %205 = vmatpush.msra.mxu0 %v86
    %206 = vmatpush.msra.mxu0 %v85
    %207 = vmatpush.msra.mxu0 %v84
    %208 = vmatpush.msra.mxu0 %v83
    %209 = vmatpush.msra.mxu0 %v82
    %210 = vmatpush.msra.mxu0 %v81
    %211 = vmatpush.msra.mxu0 %v80
    %212 = vmatpush.msra.mxu0 %v79
    %213 = vmatmul.f32.gmra.mxu0 %v27
    %v214 = vpop.f32.mrf.mxu0
    %v215 = vadd.f32 %v195, %v214
    %216 = vdwg.mxu0
    %217 = vmatpush.msra.mxu0 %v110
    %218 = vmatpush.msra.mxu0 %v109
    %219 = vmatpush.msra.mxu0 %v108
    %220 = vmatpush.msra.mxu0 %v107
    %221 = vmatpush.msra.mxu0 %v106
    %222 = vmatpush.msra.mxu0 %v105
    %223 = vmatpush.msra.mxu0 %v104
    %224 = vmatpush.msra.mxu0 %v103
    %225 = vmatpush.msra.mxu0 %v102
    %226 = vmatpush.msra.mxu0 %v101
    %227 = vmatpush.msra.mxu0 %v100
    %228 = vmatpush.msra.mxu0 %v99
    %229 = vmatpush.msra.mxu0 %v98
    %230 = vmatpush.msra.mxu0 %v97
    %231 = vmatpush.msra.mxu0 %v96
    %232 = vmatpush.msra.mxu0 %v95
    %233 = vmatmul.f32.gmra.mxu0 %v28
    %v234 = vpop.f32.mrf.mxu0
    %v235 = vadd.f32 %v215, %v234
    %236 = vdwg.mxu0
    %237 = vmatpush.msra.mxu0 %v126
    %238 = vmatpush.msra.mxu0 %v125
    %239 = vmatpush.msra.mxu0 %v124
    %240 = vmatpush.msra.mxu0 %v123
    %241 = vmatpush.msra.mxu0 %v122
    %242 = vmatpush.msra.mxu0 %v121
    %243 = vmatpush.msra.mxu0 %v120
    %244 = vmatpush.msra.mxu0 %v119
    %245 = vmatpush.msra.mxu0 %v118
    %246 = vmatpush.msra.mxu0 %v117
    %247 = vmatpush.msra.mxu0 %v116
    %248 = vmatpush.msra.mxu0 %v115
    %249 = vmatpush.msra.mxu0 %v114
    %250 = vmatpush.msra.mxu0 %v113
    %251 = vmatpush.msra.mxu0 %v112
    %252 = vmatpush.msra.mxu0 %v111
    %253 = vmatmul.f32.gmra.mxu0 %v29
    %v254 = vpop.f32.mrf.mxu0
    %v255 = vadd.f32 %v235, %v254
    %256 = vdwg.mxu0
    %257 = vmatpush.msra.mxu0 0.0
    %258 = vmatpush.msra.mxu0 0.0
    %259 = vmatpush.msra.mxu0 0.0
    %260 = vmatpush.msra.mxu0 0.0
    %261 = vmatpush.msra.mxu0 0.0
    %262 = vmatpush.msra.mxu0 0.0
    %263 = vmatpush.msra.mxu0 0.0
    %264 = vmatpush.msra.mxu0 0.0
    %265 = vmatpush.msra.mxu0 0.0
    %266 = vmatpush.msra.mxu0 0.0
    %267 = vmatpush.msra.mxu0 0.0
    %268 = vmatpush.msra.mxu0 0.0
    %269 = vmatpush.msra.mxu0 0.0
    %270 = vmatpush.msra.mxu0 0.0
    %271 = vmatpush.msra.mxu0 %v128
    %272 = vmatpush.msra.mxu0 %v127
    %273 = vmatmul.f32.gmra.mxu0 %v135
    %v274 = vpop.f32.mrf.mxu0
    %v275 = vadd.f32 %v255, %v274
    %276 = vdwg.mxu0
    %v277 = vmax.f32 %v275, 0.0
    %v278 = vld [vmem:[%s3] sm:$0xff]
    %v279 = vld [vmem:[%s3 + $0x8] sm:$0xff]
    %v280 = vld [vmem:[%s3 + $0x10] sm:$0xff]
    %v281 = vld [vmem:[%s3 + $0x18] sm:$0xff]
    %v282 = vld [vmem:[%s3 + $0x20] sm:$0xff]
    %v283 = vld [vmem:[%s3 + $0x28] sm:$0xff]
    %v284 = vld [vmem:[%s3 + $0x30] sm:$0xff]
    %v285 = vld [vmem:[%s3 + $0x38] sm:$0xff]
    %v286 = vld [vmem:[%s3 + $0x40] sm:$0x7]
    %vm287 = vcmask 547840
    %v289 = vsel %vm287, %v277, 0
    %vm291 = vcmask 1042432
    %v293 = vsel %vm291, %v286, 0
    %295 = vmatpush.msra.mxu0 0.0
    %296 = vmatpush.msra.mxu0 0.0
    %297 = vmatpush.msra.mxu0 0.0
    %298 = vmatpush.msra.mxu0 0.0
    %299 = vmatpush.msra.mxu0 0.0
    %300 = vmatpush.msra.mxu0 0.0
    %301 = vmatpush.msra.mxu0 0.0
    %302 = vmatpush.msra.mxu0 %v293
    %303 = vmatpush.msra.mxu0 %v285
    %304 = vmatpush.msra.mxu0 %v284
    %305 = vmatpush.msra.mxu0 %v283
    %306 = vmatpush.msra.mxu0 %v282
    %307 = vmatpush.msra.mxu0 %v281
    %308 = vmatpush.msra.mxu0 %v280
    %309 = vmatpush.msra.mxu0 %v279
    %310 = vmatpush.msra.mxu0 %v278
    %311 = vmatmul.f32.gmra.mxu0 %v289
    %v312 = vpop.f32.mrf.mxu0
    %v313 = vadd.f32 0.0, %v312
    %314 = vdwg.mxu0
    %v315 = vmax.f32 %v313, 0.0
    %v316 = vld [vmem:[%s4] sm:$0xff]
    %v317 = vld [vmem:[%s4 + $0x8] sm:$0xff]
    %v318 = vld [vmem:[%s4 + $0x10] sm:$0xff]
    %v319 = vld [vmem:[%s4 + $0x18] sm:$0xff]
    %v320 = vld [vmem:[%s4 + $0x20] sm:$0x1f]
    %vm321 = vcmask 302080
    %v323 = vsel %vm321, %v315, 0
    %vm325 = vcmask 1044480
    %v327 = vsel %vm325, %v320, 0
    %329 = vmatpush.msra.mxu0 0.0
    %330 = vmatpush.msra.mxu0 0.0
    %331 = vmatpush.msra.mxu0 0.0
    %332 = vmatpush.msra.mxu0 0.0
    %333 = vmatpush.msra.mxu0 0.0
    %334 = vmatpush.msra.mxu0 0.0
    %335 = vmatpush.msra.mxu0 0.0
    %336 = vmatpush.msra.mxu0 0.0
    %337 = vmatpush.msra.mxu0 0.0
    %338 = vmatpush.msra.mxu0 0.0
    %339 = vmatpush.msra.mxu0 0.0
    %340 = vmatpush.msra.mxu0 %v327
    %341 = vmatpush.msra.mxu0 %v319
    %342 = vmatpush.msra.mxu0 %v318
    %343 = vmatpush.msra.mxu0 %v317
    %344 = vmatpush.msra.mxu0 %v316
    %345 = vmatmul.f32.gmra.mxu0 %v323
    %v346 = vpop.f32.mrf.mxu0
    %v347 = vadd.f32 0.0, %v346
    %348 = vdwg.mxu0
    %v349 = vmax.f32 %v347, 0.0
    %v350 = vld [vmem:[%s5] sm:$0xff]
    %v351 = vld [vmem:[%s5 + $0x8] sm:$0xff]
    %v353 = vsel %vm133, %v349, 0
    %355 = vmatpush.msra.mxu0 0.0
    %356 = vmatpush.msra.mxu0 0.0
    %357 = vmatpush.msra.mxu0 0.0
    %358 = vmatpush.msra.mxu0 0.0
    %359 = vmatpush.msra.mxu0 0.0
    %360 = vmatpush.msra.mxu0 0.0
    %361 = vmatpush.msra.mxu0 0.0
    %362 = vmatpush.msra.mxu0 0.0
    %363 = vmatpush.msra.mxu0 0.0
    %364 = vmatpush.msra.mxu0 0.0
    %365 = vmatpush.msra.mxu0 0.0
    %366 = vmatpush.msra.mxu0 0.0
    %367 = vmatpush.msra.mxu0 0.0
    %368 = vmatpush.msra.mxu0 0.0
    %369 = vmatpush.msra.mxu0 %v351
    %370 = vmatpush.msra.mxu0 %v350
    %371 = vmatmul.f32.gmra.mxu0 %v353
    %v372 = vpop.f32.mrf.mxu0
    %v373 = vadd.f32 0.0, %v372
    %374 = vdwg.mxu0
    %vm375 = vcmask 80896
    %v376 = vsel %vm375, %v373, -inf
    %377 = vmax.xlane.f32.xlu0 %v376
    %v378 = vpop.xlane.xlu0 %377
    %v379 = vsub.f32 %v373, %v378
    %v380 = vmul.f32 %v379, 1.442695
    %v381 = vpow.pop %v380
    %v382 = vsel %vm375, %v381, 0.0
    %383 = vadd.xlane.f32.xlu0 %v382
    %v384 = vpop.xlane.xlu0 %383
    %v385 = vlog2.pop %v384
    %v386 = vmul.f32 %v385, 0.6931472
    %v387 = vadd.f32 %v378, %v386
    %v388 = vsub.f32 %v373, %v387
    %389 = vst.msk [vmem:[#allocation2] sm:$0xff] %vm375, %v388
    // Predicated region
    $region26: #{conv3d_then_linear_92.1} parent=1 // pred_check
      _
    $region27: #{conv3d_then_linear_92.1} parent=1 // pred_check_branch
      %391 = sbr.rel (0) target = $region29
    $region28: #{conv3d_then_linear_92.1} parent=1 // pred_region
      %393 = vsyncadd [#allocation3], 0
      %s395 = sshll.u32 [#allocation2], 4
      %s396 = int_to_ptr.vmem [resolvable:$true] %s395
      %s397 = sshll.u32 %s6, 4
      %s398 = int_to_ptr.hbm [resolvable:$true] %s397
      %400 = dma.vmem_to_hbm [thread:$0]  %s396, 128, %s398, [#allocation3]
    $region29: #{conv3d_then_linear_92.1} parent=1 // pred_fallthru
      _
    // Predicated region
    $region30: #{conv3d_then_linear_92.1} parent=1 // pred_check
      _
    $region31: #{conv3d_then_linear_92.1} parent=1 // pred_check_branch
      %402 = sbr.rel (0) target = $region33
    $region32: #{conv3d_then_linear_92.1} parent=1 // pred_region
      %404 = dma.done [#allocation3], 128
    $region33: #{conv3d_then_linear_92.1} parent=1 // pred_fallthru
      _
    %405 = vsyncpa [#allocation3], 1

</llo_original>
